<compile_context>
chip_gen: v5e
topology: v5e:2x2
jax: 0.10.0
libtpu: 0.0.40
codegen_flags: <defaults>
</compile_context>

<pallas_src>
import functools

import jax
import jax.numpy as jnp
from jax.experimental import pallas as pl
from jax.experimental.pallas import tpu as pltpu

GEM_EPS = 1e-6  # GeM default


# ------------------------------- Pallas kernel --------------------------------

def _gem_kernel(p_ref, x_ref, pool_ref, out_ref, *, eps, inv_s):
    """Fused GeM tile.

    p_ref:    SMEM (2,)            [p, 1/p]  (f32)
    x_ref:    (R_TILE, L_TILE)     rows = batch*channels, lanes = length (native dtype)
    pool_ref: (L_TILE, LO_TILE)    block-diagonal 0/1 window-membership matrix (bf16)
    out_ref:  (R_TILE, LO_TILE)    output in the input dtype
    """
    p = p_ref[0]
    inv_p = p_ref[1]

    # clamp -> x**p, all in f32 (cast from native dtype is free on the VPU).
    v = jnp.maximum(x_ref[...].astype(jnp.float32), eps)
    v = jnp.exp(p * jnp.log(v))                              # EUP, lane-dense

    # Non-overlapping windowed sum as one small MXU matmul (bf16 in, f32 acc),
    # then exact f32 scaling by 1/kernel_size to get the mean.
    y = jnp.dot(v.astype(jnp.bfloat16), pool_ref[...],
                preferred_element_type=jnp.float32) * inv_s

    out_ref[...] = jnp.exp(inv_p * jnp.log(y)).astype(out_ref.dtype)   # y**(1/p)


# --------------------------------- wrapper -------------------------------------

def _round_up(x, m):
    return ((x + m - 1) // m) * m


@functools.partial(jax.jit, static_argnames=("kernel_size", "eps"))
def gem_forward(x, p, *, kernel_size=8, eps=GEM_EPS):
    """GeM pooling.  x: (B, C, L) float, p: (1,) learnable exponent."""
    B, C, L = x.shape
    s = int(kernel_size)
    L_out = L // s                                   # avg_pool1d floor semantics
    R = B * C

    # Free, contiguous reshape (length stays on the lane-minor dim); native dtype.
    x2d = x[:, :, : L_out * s].reshape(R, L_out * s)

    # ---- pooled-length tiling: keep the output lane width a multiple of 128 ----
    if L_out % 128 == 0:
        lo_tile, lo_pad = 128, L_out
    elif L_out < 128:
        lo_tile, lo_pad = L_out, L_out               # tiny input: full extent
    else:
        lo_tile, lo_pad = 128, _round_up(L_out, 128)  # pad, slice afterwards
    l_tile = lo_tile * s

    # ---- row tiling: big blocks, but >= 2 grid steps so both v7x TCs get work ---
    R8 = _round_up(R, 8)
    r_tile = min(512, R8)                            # ~1-2 MiB x block, mult. of 256/8
    if R8 >= 16 and -(-R8 // r_tile) < 2:
        r_tile = _round_up((R + 1) // 2, 8)
    R_pad = _round_up(R8, r_tile)

    pad_r = R_pad - R
    pad_l = lo_pad * s - L_out * s
    if pad_r or pad_l:
        # Pad with 1.0: strictly positive (log-safe) and block-diagonal pooling
        # keeps padded columns from touching real outputs; padded rows/cols are
        # sliced off below.
        x2d = jnp.pad(x2d, ((0, pad_r), (0, pad_l)), constant_values=1.0)

    # Scalars [p, 1/p] -> SMEM.
    p_flat = p.reshape(-1).astype(jnp.float32)
    p_scalars = jnp.stack([p_flat[0], 1.0 / p_flat[0]])

    # Tiny resident 0/1 window-membership matrix (exact in bf16, 256 KiB max).
    li = jnp.arange(l_tile, dtype=jnp.int32)[:, None] // s
    oi = jnp.arange(lo_tile, dtype=jnp.int32)[None, :]
    pool = (li == oi).astype(jnp.bfloat16)

    grid = (R_pad // r_tile, lo_pad // lo_tile)

    out2d = pl.pallas_call(
        functools.partial(_gem_kernel, eps=float(eps), inv_s=1.0 / float(s)),
        out_shape=jax.ShapeDtypeStruct((R_pad, lo_pad), x.dtype),
        grid=grid,
        in_specs=[
            pl.BlockSpec(memory_space=pltpu.MemorySpace.SMEM),        # [p, 1/p]
            pl.BlockSpec((r_tile, l_tile), lambda i, j: (i, j)),      # x rows
            pl.BlockSpec((l_tile, lo_tile), lambda i, j: (0, 0)),     # pool (resident)
        ],
        out_specs=pl.BlockSpec((r_tile, lo_tile), lambda i, j: (i, j)),
        compiler_params=pltpu.CompilerParams(
            dimension_semantics=("parallel", "parallel"),
            vmem_limit_bytes=32 * 1024 * 1024),
    )(p_scalars, x2d, pool)

    return out2d[:R, :L_out].reshape(B, C, L_out)


# ------------------------------ pure-JAX reference -----------------------------

def gem_reference(x, p, kernel_size=8, eps=GEM_EPS):
    B, C, L = x.shape
    s = kernel_size
    L_out = L // s
    pr = p.reshape(1, 1, 1).astype(jnp.float32)
    xp = jnp.maximum(x[:, :, : L_out * s].astype(jnp.float32), eps) ** pr
    pooled = xp.reshape(B, C, L_out, s).mean(axis=-1)
    return pooled ** (1.0 / pr)


# ------------------------------------ main --------------------------------------

if __name__ == "__main__":
    key = jax.random.PRNGKey(0)
    p = jnp.full((1,), 3.0, jnp.float32)             # nn.Parameter(torch.ones(1) * 3)

    # Case 1: aligned small shapes (GeM default kernel_size=8).
    B, C, L, K = 2, 16, 1024, 8
    x = jax.random.normal(key, (B, C, L), dtype=jnp.float32)
    out = jax.block_until_ready(gem_forward(x, p, kernel_size=K))
    assert out.shape == (B, C, L // K), out.shape
    assert bool(jnp.all(jnp.isfinite(out)))
    ref = gem_reference(x, p, kernel_size=K)
    # bf16 MXU lhs -> ~1e-3 relative error budget (accumulation & scaling are f32).
    assert bool(jnp.allclose(out, ref, rtol=3e-3, atol=1e-5)), \
        float(jnp.max(jnp.abs(out - ref)))

    # Case 2: awkward shapes exercising the row/length padding path.
    B2, C2, L2 = 1, 3, 1072                          # L_out = 134 (not a mult. of 128)
    x2 = jax.random.normal(jax.random.PRNGKey(1), (B2, C2, L2), dtype=jnp.float32)
    out2 = jax.block_until_ready(gem_forward(x2, p, kernel_size=K))
    ref2 = gem_reference(x2, p, kernel_size=K)
    assert out2.shape == (B2, C2, L2 // K), out2.shape
    assert bool(jnp.allclose(out2, ref2, rtol=3e-3, atol=1e-5)), \
        float(jnp.max(jnp.abs(out2 - ref2)))

    print("KERNEL_OK")
</pallas_src>

<mosaic_0001>
module attributes {stable_mosaic.version = 11 : i64} {
  func.func @_gem_kernel(%arg0: i32, %arg1: i32, %arg2: memref<2xf32, #tpu.memory_space<smem>>, %arg3: memref<16x1024xf32, #tpu.memory_space<vmem>>, %arg4: memref<1024x128xbf16, #tpu.memory_space<vmem>>, %arg5: memref<16x128xf32, #tpu.memory_space<vmem>>) attributes {dimension_semantics = [#tpu.dimension_semantics<parallel>, #tpu.dimension_semantics<parallel>], iteration_bounds = array<i64: 2, 1>, scalar_prefetch = 0 : i64, scratch_operands = 0 : i64, tpu.core_type = #tpu.core_type<tc>, window_params = [{transform_indices = @transform_0, window_bounds = array<i64: 2>}, {transform_indices = @transform_1, window_bounds = array<i64: 16, 1024>}, {pipeline_mode = #tpu.pipeline_mode<synchronous>, transform_indices = @transform_2, window_bounds = array<i64: 1024, 128>}, {transform_indices = @transform_3, window_bounds = array<i64: 16, 128>}]} {
    %c0 = arith.constant 0 : index
    %0 = memref.load %arg2[%c0] : memref<2xf32, #tpu.memory_space<smem>>
    %c1 = arith.constant 1 : index
    %1 = memref.load %arg2[%c1] : memref<2xf32, #tpu.memory_space<smem>>
    %c0_0 = arith.constant 0 : index
    %c0_1 = arith.constant 0 : index
    %2 = vector.load %arg3[%c0_0, %c0_1] : memref<16x1024xf32, #tpu.memory_space<vmem>>, vector<16x1024xf32>
    %cst = arith.constant 9.99999997E-7 : f32
    %3 = vector.broadcast %cst : f32 to vector<16x1024xf32>
    %4 = arith.maximumf %2, %3 : vector<16x1024xf32>
    %5 = math.log %4 : vector<16x1024xf32>
    %6 = vector.broadcast %0 : f32 to vector<16x1024xf32>
    %7 = arith.mulf %6, %5 : vector<16x1024xf32>
    %8 = math.exp %7 : vector<16x1024xf32>
    %9 = arith.truncf %8 : vector<16x1024xf32> to vector<16x1024xbf16>
    %c0_2 = arith.constant 0 : index
    %c0_3 = arith.constant 0 : index
    %10 = vector.load %arg4[%c0_2, %c0_3] : memref<1024x128xbf16, #tpu.memory_space<vmem>>, vector<1024x128xbf16>
    %cst_4 = arith.constant dense<0.000000e+00> : vector<16x128xf32>
    %11 = tpu.matmul %9, %10, %cst_4 {dimension_numbers = #tpu.dot_dimension_numbers<[1], [0], [0], [1], [0, 0, 1, 1], [], []>} : vector<16x1024xbf16>, vector<1024x128xbf16>, vector<16x128xf32> -> vector<16x128xf32>
    %cst_5 = arith.constant 1.250000e-01 : f32
    %12 = vector.broadcast %cst_5 : f32 to vector<16x128xf32>
    %13 = arith.mulf %11, %12 : vector<16x128xf32>
    %14 = math.log %13 : vector<16x128xf32>
    %15 = vector.broadcast %1 : f32 to vector<16x128xf32>
    %16 = arith.mulf %15, %14 : vector<16x128xf32>
    %17 = math.exp %16 : vector<16x128xf32>
    %c0_6 = arith.constant 0 : index
    %c0_7 = arith.constant 0 : index
    %18 = vector.load %arg5[%c0_6, %c0_7] : memref<16x128xf32, #tpu.memory_space<vmem>>, vector<16x128xf32>
    tpu.vector_store %arg5[%c0_6, %c0_7], %17 {strides = array<i32>} : memref<16x128xf32, #tpu.memory_space<vmem>>, vector<16x128xf32>,
    return
  }
  func.func @transform_0(%arg0: i32, %arg1: i32) -> i32 {
    %c0_i32 = arith.constant 0 : i32
    %c0_i32_0 = arith.constant 0 : i32
    return %c0_i32 : i32
  }
  func.func @transform_1(%arg0: i32, %arg1: i32) -> (i32, i32) {
    %c0_i32 = arith.constant 0 : i32
    return %arg0, %arg1 : i32, i32
  }
  func.func @transform_2(%arg0: i32, %arg1: i32) -> (i32, i32) {
    %c0_i32 = arith.constant 0 : i32
    %c0_i32_0 = arith.constant 0 : i32
    %c0_i32_1 = arith.constant 0 : i32
    return %c0_i32, %c0_i32_0 : i32, i32
  }
  func.func @transform_3(%arg0: i32, %arg1: i32) -> (i32, i32) {
    %c0_i32 = arith.constant 0 : i32
    return %arg0, %arg1 : i32, i32
  }
}

</mosaic_0001>

<llo_original>
// kernel: gem_forward.1
$region0: #{gem_forward.1}
  #allocation0 [shape = 'u32[]', space=smem, size = 0x4, offset = 0x4, fixed_abs, tag = 'smem constant byte address 0x4 - core index']
  #allocation1 [shape = 'u32[72,128]{1,0:T(1,128)}', space=vmem, size = 0x9000, scoped, tag = 'internal scratch']
  %s0 = inlined_call_operand.vmem [shape: f32[2], index: 0, kind: input, shape index: {}]
  %s1 = inlined_call_operand.vmem [shape: f32[32,1024], index: 1, kind: input, shape index: {}]
  %s2 = inlined_call_operand.vmem [shape: bf16[1024,128], index: 2, kind: input, shape index: {}]
  %s3 = inlined_call_operand.hbm [shape: f32[32,128], index: 3, kind: output, shape index: {}]
  %s4 = sld [smem:[#allocation0]]
  $region49: #{gem_forward.1} parent=0
    _
  %s6 = ssub.s32 1, %s4
  %s7 = scalar_select 0, %s6, %s4
  $region1: #{gem_forward.1} parent=0
    #allocation2 [shape = 'u8[512]{0}', space=smem, size = 0x200, scoped, tag = 'input window, operand 0, single buffered']
    #allocation3 [shape = 's32[2]{0}', space=sflag, size = 0x8, scoped, tag = 'scoped memory for gem_forward.1']
    #allocation4 [shape = 's32[2]{0}', space=sflag, size = 0x8, scoped, tag = 'scoped memory for gem_forward.1']
    #allocation5 [shape = 'u8[16384]{0}', space=vmem, size = 0x4000, scoped, tag = 'output window, operand 0']
    %8 = vsyncpa [#allocation4], 0
    %9 = vsyncpa [#allocation3], 0
    %s10 = scalar_lea.sflag [#allocation3], 1
    %11 = vsyncpa %s10, 0
    loop: start=0, step=1, limit=4
    $region2: #{gem_forward.1} parent=1 // loop_pre_header
      _
    $region3: #{gem_forward.1} parent=1 // loop_header
      %s13 = sphi 0, %s17
      %p14 = scmp.ge.s32.totalorder %s13, 4
      %s20 = sphi 0, %s32
      %s21 = sphi 0, %s28
      %s22 = sphi 0, %s20
      %s23 = sphi 0, %s21
      %s24 = sphi 0, %s22
      %s25 = sphi 0, %s23
      %s33 = sphi 0, %s33
      %s35 = sphi 0, %s33
      %s36 = sphi 0, %s35
      %s50 = sphi 0, %s36
      %s58 = sphi 0, %s60
      %s61 = sphi 0, %s58
      %s62 = sphi 0, %s61
      %s78 = sphi 0, %s62
      %s82 = sphi 0, %s82
      %s84 = sphi 0, %s82
      %s85 = sphi 0, %s84
      %s99 = sphi 0, %s85
      %s107 = sphi 0, %s109
      %s110 = sphi 0, %s107
      %s111 = sphi 0, %s110
      %s127 = sphi 0, %s111
    $region4: #{gem_forward.1} parent=1 // loop_header_branch
      %16 = sbr.rel (%p14) target = $region8
    $region5: #{gem_forward.1} parent=1 // loop_body
      %s18 = ssub.s32 %s13, 1
      %s19 = ssub.s32 %s13, 2
      %s26 = sadd.s32 1, %s21
      %p27 = scmp.ge.s32.totalorder %s26, 1
      %s28 = scalar_select %p27, 0, %s26
      %s29 = sadd.s32 1, %s20
      %s30 = scalar_select %p27, %s29, %s20
      %p31 = scmp.ge.s32.totalorder %s30, 2
      %s32 = scalar_select %p31, 0, %s30
      %s34 = sadd.s32 %s33, 1
      %p37 = scmp.eq.s32.totalorder %s13, 1
      %p38 = scmp.ne.s32.totalorder %s33, %s35
      %p39 = scmp.eq.s32.totalorder %s13, 0
      %p40 = por %p38, %p39
      %p41 = scmp.ne.s32.totalorder %s33, %s35
      %p42 = scmp.eq.s32.totalorder %s18, 1
      %p43 = por %p41, %p42
      %p44 = scmp.ne.s32.totalorder %s35, %s36
      %p45 = scmp.eq.s32.totalorder %s18, 0
      %p46 = por %p44, %p45
      %p47 = scmp.ne.s32.totalorder %s35, %s36
      %p48 = scmp.eq.s32.totalorder %s19, 1
      %p49 = por %p47, %p48
      %p51 = scmp.ne.s32.totalorder %s36, %s50
      %p52 = scmp.eq.s32.totalorder %s19, 0
      %p53 = por %p51, %p52
      %s54 = ssub.s32 %s20, %s32
      %s55 = ssub.s32 %s21, %s28
      %s56 = sor.u32 %s54, %s55
      %p57 = scmp.eq.s32.totalorder %s56, 0
      %s59 = sadd.s32 %s58, 1
      %s60 = scalar_select %p57, %s58, %s59
      %p63 = pneg %p57
      %p64 = scmp.eq.s32.totalorder %s13, 1
      %p65 = por %p63, %p64
      %p66 = scmp.ne.s32.totalorder %s58, %s61
      %p67 = scmp.eq.s32.totalorder %s13, 0
      %p68 = por %p66, %p67
      %p69 = scmp.ne.s32.totalorder %s58, %s61
      %p70 = scmp.eq.s32.totalorder %s18, 1
      %p71 = por %p69, %p70
      %p72 = scmp.ne.s32.totalorder %s61, %s62
      %p73 = scmp.eq.s32.totalorder %s18, 0
      %p74 = por %p72, %p73
      %p75 = scmp.ne.s32.totalorder %s61, %s62
      %p76 = scmp.eq.s32.totalorder %s19, 1
      %p77 = por %p75, %p76
      %p79 = scmp.ne.s32.totalorder %s62, %s78
      %p80 = scmp.eq.s32.totalorder %s19, 0
      %p81 = por %p79, %p80
      %s83 = sadd.s32 %s82, 1
      %p86 = scmp.eq.s32.totalorder %s13, 1
      %p87 = scmp.ne.s32.totalorder %s82, %s84
      %p88 = scmp.eq.s32.totalorder %s13, 0
      %p89 = por %p87, %p88
      %p90 = scmp.ne.s32.totalorder %s82, %s84
      %p91 = scmp.eq.s32.totalorder %s18, 1
      %p92 = por %p90, %p91
      %p93 = scmp.ne.s32.totalorder %s84, %s85
      %p94 = scmp.eq.s32.totalorder %s18, 0
      %p95 = por %p93, %p94
      %p96 = scmp.ne.s32.totalorder %s84, %s85
      %p97 = scmp.eq.s32.totalorder %s19, 1
      %p98 = por %p96, %p97
      %p100 = scmp.ne.s32.totalorder %s85, %s99
      %p101 = scmp.eq.s32.totalorder %s19, 0
      %p102 = por %p100, %p101
      %s103 = ssub.s32 %s20, %s32
      %s104 = ssub.s32 %s21, %s28
      %s105 = sor.u32 %s103, %s104
      %p106 = scmp.eq.s32.totalorder %s105, 0
      %s108 = sadd.s32 %s107, 1
      %s109 = scalar_select %p106, %s107, %s108
      %p112 = pneg %p106
      %p113 = scmp.eq.s32.totalorder %s13, 1
      %p114 = por %p112, %p113
      %p115 = scmp.ne.s32.totalorder %s107, %s110
      %p116 = scmp.eq.s32.totalorder %s13, 0
      %p117 = por %p115, %p116
      %p118 = scmp.ne.s32.totalorder %s107, %s110
      %p119 = scmp.eq.s32.totalorder %s18, 1
      %p120 = por %p118, %p119
      %p121 = scmp.ne.s32.totalorder %s110, %s111
      %p122 = scmp.eq.s32.totalorder %s18, 0
      %p123 = por %p121, %p122
      %p124 = scmp.ne.s32.totalorder %s110, %s111
      %p125 = scmp.eq.s32.totalorder %s19, 1
      %p126 = por %p124, %p125
      %p128 = scmp.ne.s32.totalorder %s111, %s127
      %p129 = scmp.eq.s32.totalorder %s19, 0
      %p130 = por %p128, %p129
      %p131 = scmp.le.s32.totalorder 1, %s13
      %p132 = scmp.lt.s32.totalorder %s13, 3
      %p133 = pnand %p131, %p132
      %p134 = pneg %p133
      // Predicated region
      $region9: #{gem_forward.1} parent=5 // pred_check
        _
      $region10: #{gem_forward.1} parent=5 // pred_check_branch
        %136 = sbr.rel (%p133) target = $region12
      $region11: #{gem_forward.1} parent=5 // pred_region
        %s137 = ssub.s32 %s13, 1
        // Predicated region
        $region13: #{gem_forward.1} parent=11 // pred_check
          %p138 = pneg %p46
        $region14: #{gem_forward.1} parent=11 // pred_check_branch
          %140 = sbr.rel (%p138) target = $region16
        $region15: #{gem_forward.1} parent=11 // pred_region
          %142 = vsyncadd [#allocation4], 0
          %s144 = sshll.u32 %s0, 4
          %s145 = int_to_ptr.vmem [resolvable:$true] %s144
          %147 = dma.vmem_to_smem %s145, 16, [#allocation2], [#allocation4]
        $region16: #{gem_forward.1} parent=11 // pred_fallthru
          _
        // Predicated region
        $region17: #{gem_forward.1} parent=11 // pred_check
          %p148 = pneg %p95
        $region18: #{gem_forward.1} parent=11 // pred_check_branch
          %150 = sbr.rel (%p148) target = $region20
        $region19: #{gem_forward.1} parent=11 // pred_region
          _
        $region20: #{gem_forward.1} parent=11 // pred_fallthru
          _
      $region12: #{gem_forward.1} parent=5 // pred_fallthru
        _
      %p151 = scmp.lt.s32.totalorder %s13, 2
      // Predicated region
      $region21: #{gem_forward.1} parent=5 // pred_check
        %p152 = pneg %p151
      $region22: #{gem_forward.1} parent=5 // pred_check_branch
        %154 = sbr.rel (%p152) target = $region24
      $region23: #{gem_forward.1} parent=5 // pred_region
        // Predicated region
        $region25: #{gem_forward.1} parent=23 // pred_check
          %p155 = pneg %p68
        $region26: #{gem_forward.1} parent=23 // pred_check_branch
          %157 = sbr.rel (%p155) target = $region28
        $region27: #{gem_forward.1} parent=23 // pred_region
          %s158 = smul.u32 2, %s20
          %s159 = smul.u32 8, %s21
          %p160 = scmp.lt.s32.totalorder %s158, 3
          %s161 = scalar_select %p160, %s158, 3
          %p162 = scmp.lt.s32.totalorder %s159, 7
          %s163 = scalar_select %p162, %s159, 7
          %s164 = smul.addr %s161, 8
          %s165 = sadd.s32 %s163, %s164
          %s166 = smul.addr %s165, 8
          %s167 = scalar_lea.vmem %s1, %s166
          %s168 = smul.u32 2, %s20
          %s169 = smul.u32 8, %s21
        $region28: #{gem_forward.1} parent=23 // pred_fallthru
          _
      $region24: #{gem_forward.1} parent=5 // pred_fallthru
        _
      %p170 = scmp.le.s32.totalorder 1, %s13
      %p171 = scmp.lt.s32.totalorder %s13, 3
      %p172 = pnand %p170, %p171
      %p173 = pneg %p172
      // Predicated region
      $region29: #{gem_forward.1} parent=5 // pred_check
        _
      $region30: #{gem_forward.1} parent=5 // pred_check_branch
        %175 = sbr.rel (%p172) target = $region32
      $region31: #{gem_forward.1} parent=5 // pred_region
        %s176 = ssub.s32 %s13, 1
        // Predicated region
        $region33: #{gem_forward.1} parent=31 // pred_check
          %p177 = pneg %p46
        $region34: #{gem_forward.1} parent=31 // pred_check_branch
          %179 = sbr.rel (%p177) target = $region36
        $region35: #{gem_forward.1} parent=31 // pred_region
          %181 = dma.done [#allocation4], 16
        $region36: #{gem_forward.1} parent=31 // pred_fallthru
          _
        %182 = sfence
        %p183 = pneg %p46
        %p184 = pneg %p43
        %s185 = smul.u32 2, %s22
        %s186 = smul.u32 8, %s23
        %p187 = scmp.lt.s32.totalorder %s185, 3
        %s188 = scalar_select %p187, %s185, 3
        %p189 = scmp.lt.s32.totalorder %s186, 7
        %s190 = scalar_select %p189, %s186, 7
        %s191 = smul.addr %s188, 8
        %s192 = sadd.s32 %s190, %s191
        %s193 = smul.addr %s192, 8
        %s194 = scalar_lea.vmem %s1, %s193
        %p195 = pneg %p74
        %p196 = pneg %p71
        %p197 = pneg %p95
        %p198 = pneg %p92
        %p199 = pneg %p123
        %p200 = pneg %p120
        %s201 = sand.u32 %s110, 1
        %s202 = scalar_lea.sflag [#allocation3], %s201
        %s203 = sand.u32 %s110, 1
        %s204 = smul.addr %s203, 16
        %s205 = scalar_lea.vmem [#allocation5], %s204
        %s206 = smul.u32 2, %s22
        %s207 = smul.u32 8, %s23
        %p208 = scmp.lt.s32.totalorder %s206, 3
        %s209 = scalar_select %p208, %s206, 3
        %p210 = scmp.lt.s32.totalorder %s207, 7
        %s211 = scalar_select %p210, %s207, 7
        %s212 = smul.addr %s209, 8
        %s213 = sadd.s32 %s211, %s212
        %s214 = smul.addr %s213, 8
        %s215 = scalar_lea.vmem %s1, %s214
        %s216 = smul.u32 2, %s22
        %s217 = smul.u32 8, %s23
        %s218 = smul.u32 2, %s22
        %s219 = sld [smem:[#allocation2]]
        %s220 = sld [smem:[#allocation2 + $0x1]]
        %v221 = vld [vmem:[%s215] sm:$0xff]
        %v222 = vld [vmem:[%s215 + $0x8] sm:$0xff]
        %v223 = vld [vmem:[%s215 + $0x10] sm:$0xff]
        %v224 = vld [vmem:[%s215 + $0x18] sm:$0xff]
        %v225 = vld [vmem:[%s215 + $0x20] sm:$0xff]
        %v226 = vld [vmem:[%s215 + $0x28] sm:$0xff]
        %v227 = vld [vmem:[%s215 + $0x30] sm:$0xff]
        %v228 = vld [vmem:[%s215 + $0x38] sm:$0xff]
        %v229 = vld [vmem:[%s215 + $0x40] sm:$0xff]
        %v230 = vld [vmem:[%s215 + $0x48] sm:$0xff]
        %v231 = vld [vmem:[%s215 + $0x50] sm:$0xff]
        %v232 = vld [vmem:[%s215 + $0x58] sm:$0xff]
        %v233 = vld [vmem:[%s215 + $0x60] sm:$0xff]
        %v234 = vld [vmem:[%s215 + $0x68] sm:$0xff]
        %v235 = vld [vmem:[%s215 + $0x70] sm:$0xff]
        %v236 = vld [vmem:[%s215 + $0x78] sm:$0xff]
        %v237 = vmax.f32 %v221, 1e-06
        %v238 = vmax.f32 %v222, 1e-06
        %v239 = vmax.f32 %v223, 1e-06
        %v240 = vmax.f32 %v224, 1e-06
        %v241 = vmax.f32 %v225, 1e-06
        %v242 = vmax.f32 %v226, 1e-06
        %v243 = vmax.f32 %v227, 1e-06
        %v244 = vmax.f32 %v228, 1e-06
        %v245 = vmax.f32 %v229, 1e-06
        %v246 = vmax.f32 %v230, 1e-06
        %v247 = vmax.f32 %v231, 1e-06
        %v248 = vmax.f32 %v232, 1e-06
        %v249 = vmax.f32 %v233, 1e-06
        %v250 = vmax.f32 %v234, 1e-06
        %v251 = vmax.f32 %v235, 1e-06
        %v252 = vmax.f32 %v236, 1e-06
        %v253 = vlog2.pop %v237
        %v254 = vmul.f32 %v253, 0.6931472
        %v255 = vlog2.pop %v238
        %v256 = vmul.f32 %v255, 0.6931472
        %v257 = vlog2.pop %v239
        %v258 = vmul.f32 %v257, 0.6931472
        %v259 = vlog2.pop %v240
        %v260 = vmul.f32 %v259, 0.6931472
        %v261 = vlog2.pop %v241
        %v262 = vmul.f32 %v261, 0.6931472
        %v263 = vlog2.pop %v242
        %v264 = vmul.f32 %v263, 0.6931472
        %v265 = vlog2.pop %v243
        %v266 = vmul.f32 %v265, 0.6931472
        %v267 = vlog2.pop %v244
        %v268 = vmul.f32 %v267, 0.6931472
        %v269 = vlog2.pop %v245
        %v270 = vmul.f32 %v269, 0.6931472
        %v271 = vlog2.pop %v246
        %v272 = vmul.f32 %v271, 0.6931472
        %v273 = vlog2.pop %v247
        %v274 = vmul.f32 %v273, 0.6931472
        %v275 = vlog2.pop %v248
        %v276 = vmul.f32 %v275, 0.6931472
        %v277 = vlog2.pop %v249
        %v278 = vmul.f32 %v277, 0.6931472
        %v279 = vlog2.pop %v250
        %v280 = vmul.f32 %v279, 0.6931472
        %v281 = vlog2.pop %v251
        %v282 = vmul.f32 %v281, 0.6931472
        %v283 = vlog2.pop %v252
        %v284 = vmul.f32 %v283, 0.6931472
        %v285 = vstv %s219
        %v286 = vmul.f32 %v285, %v254
        %v287 = vmul.f32 %v285, %v256
        %v288 = vmul.f32 %v285, %v258
        %v289 = vmul.f32 %v285, %v260
        %v290 = vmul.f32 %v285, %v262
        %v291 = vmul.f32 %v285, %v264
        %v292 = vmul.f32 %v285, %v266
        %v293 = vmul.f32 %v285, %v268
        %v294 = vmul.f32 %v285, %v270
        %v295 = vmul.f32 %v285, %v272
        %v296 = vmul.f32 %v285, %v274
        %v297 = vmul.f32 %v285, %v276
        %v298 = vmul.f32 %v285, %v278
        %v299 = vmul.f32 %v285, %v280
        %v300 = vmul.f32 %v285, %v282
        %v301 = vmul.f32 %v285, %v284
        %v302 = vmul.f32 %v286, 1.442695
        %v303 = vpow.pop %v302
        %v304 = vmul.f32 %v287, 1.442695
        %v305 = vpow.pop %v304
        %v306 = vmul.f32 %v288, 1.442695
        %v307 = vpow.pop %v306
        %v308 = vmul.f32 %v289, 1.442695
        %v309 = vpow.pop %v308
        %v310 = vmul.f32 %v290, 1.442695
        %v311 = vpow.pop %v310
        %v312 = vmul.f32 %v291, 1.442695
        %v313 = vpow.pop %v312
        %v314 = vmul.f32 %v292, 1.442695
        %v315 = vpow.pop %v314
        %v316 = vmul.f32 %v293, 1.442695
        %v317 = vpow.pop %v316
        %v318 = vmul.f32 %v294, 1.442695
        %v319 = vpow.pop %v318
        %v320 = vmul.f32 %v295, 1.442695
        %v321 = vpow.pop %v320
        %v322 = vmul.f32 %v296, 1.442695
        %v323 = vpow.pop %v322
        %v324 = vmul.f32 %v297, 1.442695
        %v325 = vpow.pop %v324
        %v326 = vmul.f32 %v298, 1.442695
        %v327 = vpow.pop %v326
        %v328 = vmul.f32 %v299, 1.442695
        %v329 = vpow.pop %v328
        %v330 = vmul.f32 %v300, 1.442695
        %v331 = vpow.pop %v330
        %v332 = vmul.f32 %v301, 1.442695
        %v333 = vpow.pop %v332
        %v334 = vpack.c.bf16 %v319, %v303
        %v335 = vpack.c.bf16 %v321, %v305
        %v336 = vpack.c.bf16 %v323, %v307
        %v337 = vpack.c.bf16 %v325, %v309
        %v338 = vpack.c.bf16 %v327, %v311
        %v339 = vpack.c.bf16 %v329, %v313
        %v340 = vpack.c.bf16 %v331, %v315
        %v341 = vpack.c.bf16 %v333, %v317
        %v342 = vld [vmem:[%s2] sm:$0xf]
        %v343 = vld [vmem:[%s2 + $0x4] sm:$0xf]
        %v344 = vld [vmem:[%s2 + $0x8] sm:$0xf]
        %v345 = vld [vmem:[%s2 + $0xc] sm:$0xf]
        %v346 = vld [vmem:[%s2 + $0x10] sm:$0xf]
        %v347 = vld [vmem:[%s2 + $0x14] sm:$0xf]
        %v348 = vld [vmem:[%s2 + $0x18] sm:$0xf]
        %v349 = vld [vmem:[%s2 + $0x1c] sm:$0xf]
        %v350 = vld [vmem:[%s2 + $0x20] sm:$0xf]
        %v351 = vld [vmem:[%s2 + $0x24] sm:$0xf]
        %v352 = vld [vmem:[%s2 + $0x28] sm:$0xf]
        %v353 = vld [vmem:[%s2 + $0x2c] sm:$0xf]
        %v354 = vld [vmem:[%s2 + $0x30] sm:$0xf]
        %v355 = vld [vmem:[%s2 + $0x34] sm:$0xf]
        %v356 = vld [vmem:[%s2 + $0x38] sm:$0xf]
        %v357 = vld [vmem:[%s2 + $0x3c] sm:$0xf]
        %v358 = vld [vmem:[%s2 + $0x40] sm:$0xf]
        %v359 = vld [vmem:[%s2 + $0x44] sm:$0xf]
        %v360 = vld [vmem:[%s2 + $0x48] sm:$0xf]
        %v361 = vld [vmem:[%s2 + $0x4c] sm:$0xf]
        %v362 = vld [vmem:[%s2 + $0x50] sm:$0xf]
        %v363 = vld [vmem:[%s2 + $0x54] sm:$0xf]
        %v364 = vld [vmem:[%s2 + $0x58] sm:$0xf]
        %v365 = vld [vmem:[%s2 + $0x5c] sm:$0xf]
        %v366 = vld [vmem:[%s2 + $0x60] sm:$0xf]
        %v367 = vld [vmem:[%s2 + $0x64] sm:$0xf]
        %v368 = vld [vmem:[%s2 + $0x68] sm:$0xf]
        %v369 = vld [vmem:[%s2 + $0x6c] sm:$0xf]
        %v370 = vld [vmem:[%s2 + $0x70] sm:$0xf]
        %v371 = vld [vmem:[%s2 + $0x74] sm:$0xf]
        %v372 = vld [vmem:[%s2 + $0x78] sm:$0xf]
        %v373 = vld [vmem:[%s2 + $0x7c] sm:$0xf]
        %v374 = vld [vmem:[%s2 + $0x80] sm:$0xf]
        %v375 = vld [vmem:[%s2 + $0x84] sm:$0xf]
        %v376 = vld [vmem:[%s2 + $0x88] sm:$0xf]
        %v377 = vld [vmem:[%s2 + $0x8c] sm:$0xf]
        %v378 = vld [vmem:[%s2 + $0x90] sm:$0xf]
        %v379 = vld [vmem:[%s2 + $0x94] sm:$0xf]
        %v380 = vld [vmem:[%s2 + $0x98] sm:$0xf]
        %v381 = vld [vmem:[%s2 + $0x9c] sm:$0xf]
        %v382 = vld [vmem:[%s2 + $0xa0] sm:$0xf]
        %v383 = vld [vmem:[%s2 + $0xa4] sm:$0xf]
        %v384 = vld [vmem:[%s2 + $0xa8] sm:$0xf]
        %v385 = vld [vmem:[%s2 + $0xac] sm:$0xf]
        %v386 = vld [vmem:[%s2 + $0xb0] sm:$0xf]
        %v387 = vld [vmem:[%s2 + $0xb4] sm:$0xf]
        %v388 = vld [vmem:[%s2 + $0xb8] sm:$0xf]
        %v389 = vld [vmem:[%s2 + $0xbc] sm:$0xf]
        %v390 = vld [vmem:[%s2 + $0xc0] sm:$0xf]
        %v391 = vld [vmem:[%s2 + $0xc4] sm:$0xf]
        %v392 = vld [vmem:[%s2 + $0xc8] sm:$0xf]
        %v393 = vld [vmem:[%s2 + $0xcc] sm:$0xf]
        %v394 = vld [vmem:[%s2 + $0xd0] sm:$0xf]
        %v395 = vld [vmem:[%s2 + $0xd4] sm:$0xf]
        %v396 = vld [vmem:[%s2 + $0xd8] sm:$0xf]
        %v397 = vld [vmem:[%s2 + $0xdc] sm:$0xf]
        %v398 = vld [vmem:[%s2 + $0xe0] sm:$0xf]
        %v399 = vld [vmem:[%s2 + $0xe4] sm:$0xf]
        %v400 = vld [vmem:[%s2 + $0xe8] sm:$0xf]
        %v401 = vld [vmem:[%s2 + $0xec] sm:$0xf]
        %v402 = vld [vmem:[%s2 + $0xf0] sm:$0xf]
        %v403 = vld [vmem:[%s2 + $0xf4] sm:$0xf]
        %v404 = vld [vmem:[%s2 + $0xf8] sm:$0xf]
        %v405 = vld [vmem:[%s2 + $0xfc] sm:$0xf]
        %v406 = vld [vmem:[%s2 + $0x100] sm:$0xf]
        %v407 = vld [vmem:[%s2 + $0x104] sm:$0xf]
        %v408 = vld [vmem:[%s2 + $0x108] sm:$0xf]
        %v409 = vld [vmem:[%s2 + $0x10c] sm:$0xf]
        %v410 = vld [vmem:[%s2 + $0x110] sm:$0xf]
        %v411 = vld [vmem:[%s2 + $0x114] sm:$0xf]
        %v412 = vld [vmem:[%s2 + $0x118] sm:$0xf]
        %v413 = vld [vmem:[%s2 + $0x11c] sm:$0xf]
        %v414 = vld [vmem:[%s2 + $0x120] sm:$0xf]
        %v415 = vld [vmem:[%s2 + $0x124] sm:$0xf]
        %v416 = vld [vmem:[%s2 + $0x128] sm:$0xf]
        %v417 = vld [vmem:[%s2 + $0x12c] sm:$0xf]
        %v418 = vld [vmem:[%s2 + $0x130] sm:$0xf]
        %v419 = vld [vmem:[%s2 + $0x134] sm:$0xf]
        %v420 = vld [vmem:[%s2 + $0x138] sm:$0xf]
        %v421 = vld [vmem:[%s2 + $0x13c] sm:$0xf]
        %v422 = vld [vmem:[%s2 + $0x140] sm:$0xf]
        %v423 = vld [vmem:[%s2 + $0x144] sm:$0xf]
        %v424 = vld [vmem:[%s2 + $0x148] sm:$0xf]
        %v425 = vld [vmem:[%s2 + $0x14c] sm:$0xf]
        %v426 = vld [vmem:[%s2 + $0x150] sm:$0xf]
        %v427 = vld [vmem:[%s2 + $0x154] sm:$0xf]
        %v428 = vld [vmem:[%s2 + $0x158] sm:$0xf]
        %v429 = vld [vmem:[%s2 + $0x15c] sm:$0xf]
        %v430 = vld [vmem:[%s2 + $0x160] sm:$0xf]
        %v431 = vld [vmem:[%s2 + $0x164] sm:$0xf]
        %v432 = vld [vmem:[%s2 + $0x168] sm:$0xf]
        %v433 = vld [vmem:[%s2 + $0x16c] sm:$0xf]
        %v434 = vld [vmem:[%s2 + $0x170] sm:$0xf]
        %v435 = vld [vmem:[%s2 + $0x174] sm:$0xf]
        %v436 = vld [vmem:[%s2 + $0x178] sm:$0xf]
        %v437 = vld [vmem:[%s2 + $0x17c] sm:$0xf]
        %v438 = vld [vmem:[%s2 + $0x180] sm:$0xf]
        %v439 = vld [vmem:[%s2 + $0x184] sm:$0xf]
        %v440 = vld [vmem:[%s2 + $0x188] sm:$0xf]
        %v441 = vld [vmem:[%s2 + $0x18c] sm:$0xf]
        %v442 = vld [vmem:[%s2 + $0x190] sm:$0xf]
        %v443 = vld [vmem:[%s2 + $0x194] sm:$0xf]
        %v444 = vld [vmem:[%s2 + $0x198] sm:$0xf]
        %v445 = vld [vmem:[%s2 + $0x19c] sm:$0xf]
        %v446 = vld [vmem:[%s2 + $0x1a0] sm:$0xf]
        %v447 = vld [vmem:[%s2 + $0x1a4] sm:$0xf]
        %v448 = vld [vmem:[%s2 + $0x1a8] sm:$0xf]
        %v449 = vld [vmem:[%s2 + $0x1ac] sm:$0xf]
        %v450 = vld [vmem:[%s2 + $0x1b0] sm:$0xf]
        %v451 = vld [vmem:[%s2 + $0x1b4] sm:$0xf]
        %v452 = vld [vmem:[%s2 + $0x1b8] sm:$0xf]
        %v453 = vld [vmem:[%s2 + $0x1bc] sm:$0xf]
        %v454 = vld [vmem:[%s2 + $0x1c0] sm:$0xf]
        %v455 = vld [vmem:[%s2 + $0x1c4] sm:$0xf]
        %v456 = vld [vmem:[%s2 + $0x1c8] sm:$0xf]
        %v457 = vld [vmem:[%s2 + $0x1cc] sm:$0xf]
        %v458 = vld [vmem:[%s2 + $0x1d0] sm:$0xf]
        %v459 = vld [vmem:[%s2 + $0x1d4] sm:$0xf]
        %v460 = vld [vmem:[%s2 + $0x1d8] sm:$0xf]
        %v461 = vld [vmem:[%s2 + $0x1dc] sm:$0xf]
        %v462 = vld [vmem:[%s2 + $0x1e0] sm:$0xf]
        %v463 = vld [vmem:[%s2 + $0x1e4] sm:$0xf]
        %v464 = vld [vmem:[%s2 + $0x1e8] sm:$0xf]
        %v465 = vld [vmem:[%s2 + $0x1ec] sm:$0xf]
        %v466 = vld [vmem:[%s2 + $0x1f0] sm:$0xf]
        %v467 = vld [vmem:[%s2 + $0x1f4] sm:$0xf]
        %v468 = vld [vmem:[%s2 + $0x1f8] sm:$0xf]
        %v469 = vld [vmem:[%s2 + $0x1fc] sm:$0xf]
        %v598 = vunpack.c.l.b16 %v342
        %v599 = vunpack.c.l.b16 %v343
        %v600 = vunpack.c.l.b16 %v344
        %v601 = vunpack.c.l.b16 %v345
        %v602 = vunpack.c.l.b16 %v346
        %v603 = vunpack.c.l.b16 %v347
        %v604 = vunpack.c.l.b16 %v348
        %v605 = vunpack.c.l.b16 %v349
        %v606 = vunpack.c.l.b16 %v350
        %v607 = vunpack.c.l.b16 %v351
        %v608 = vunpack.c.l.b16 %v352
        %v609 = vunpack.c.l.b16 %v353
        %v610 = vunpack.c.l.b16 %v354
        %v611 = vunpack.c.l.b16 %v355
        %v612 = vunpack.c.l.b16 %v356
        %v613 = vunpack.c.l.b16 %v357
        %v614 = vunpack.c.l.b16 %v358
        %v615 = vunpack.c.l.b16 %v359
        %v616 = vunpack.c.l.b16 %v360
        %v617 = vunpack.c.l.b16 %v361
        %v618 = vunpack.c.l.b16 %v362
        %v619 = vunpack.c.l.b16 %v363
        %v620 = vunpack.c.l.b16 %v364
        %v621 = vunpack.c.l.b16 %v365
        %v622 = vunpack.c.l.b16 %v366
        %v623 = vunpack.c.l.b16 %v367
        %v624 = vunpack.c.l.b16 %v368
        %v625 = vunpack.c.l.b16 %v369
        %v626 = vunpack.c.l.b16 %v370
        %v627 = vunpack.c.l.b16 %v371
        %v628 = vunpack.c.l.b16 %v372
        %v629 = vunpack.c.l.b16 %v373
        %v630 = vunpack.c.l.b16 %v374
        %v631 = vunpack.c.l.b16 %v375
        %v632 = vunpack.c.l.b16 %v376
        %v633 = vunpack.c.l.b16 %v377
        %v634 = vunpack.c.l.b16 %v378
        %v635 = vunpack.c.l.b16 %v379
        %v636 = vunpack.c.l.b16 %v380
        %v637 = vunpack.c.l.b16 %v381
        %v638 = vunpack.c.l.b16 %v382
        %v639 = vunpack.c.l.b16 %v383
        %v640 = vunpack.c.l.b16 %v384
        %v641 = vunpack.c.l.b16 %v385
        %v642 = vunpack.c.l.b16 %v386
        %v643 = vunpack.c.l.b16 %v387
        %v644 = vunpack.c.l.b16 %v388
        %v645 = vunpack.c.l.b16 %v389
        %v646 = vunpack.c.l.b16 %v390
        %v647 = vunpack.c.l.b16 %v391
        %v648 = vunpack.c.l.b16 %v392
        %v649 = vunpack.c.l.b16 %v393
        %v650 = vunpack.c.l.b16 %v394
        %v651 = vunpack.c.l.b16 %v395
        %v652 = vunpack.c.l.b16 %v396
        %v653 = vunpack.c.l.b16 %v397
        %v654 = vunpack.c.l.b16 %v398
        %v655 = vunpack.c.l.b16 %v399
        %v656 = vunpack.c.l.b16 %v400
        %v657 = vunpack.c.l.b16 %v401
        %v658 = vunpack.c.l.b16 %v402
        %v659 = vunpack.c.l.b16 %v403
        %v660 = vunpack.c.l.b16 %v404
        %v661 = vunpack.c.l.b16 %v405
        %v662 = vunpack.c.l.b16 %v406
        %v663 = vunpack.c.l.b16 %v407
        %v664 = vunpack.c.l.b16 %v408
        %v665 = vunpack.c.l.b16 %v409
        %v666 = vunpack.c.l.b16 %v410
        %v667 = vunpack.c.l.b16 %v411
        %v668 = vunpack.c.l.b16 %v412
        %v669 = vunpack.c.l.b16 %v413
        %v670 = vunpack.c.l.b16 %v414
        %v671 = vunpack.c.l.b16 %v415
        %v672 = vunpack.c.l.b16 %v416
        %v673 = vunpack.c.l.b16 %v417
        %v674 = vunpack.c.l.b16 %v418
        %v675 = vunpack.c.l.b16 %v419
        %v676 = vunpack.c.l.b16 %v420
        %v677 = vunpack.c.l.b16 %v421
        %v678 = vunpack.c.l.b16 %v422
        %v679 = vunpack.c.l.b16 %v423
        %v680 = vunpack.c.l.b16 %v424
        %v681 = vunpack.c.l.b16 %v425
        %v682 = vunpack.c.l.b16 %v426
        %v683 = vunpack.c.l.b16 %v427
        %v684 = vunpack.c.l.b16 %v428
        %v685 = vunpack.c.l.b16 %v429
        %v686 = vunpack.c.l.b16 %v430
        %v687 = vunpack.c.l.b16 %v431
        %v688 = vunpack.c.l.b16 %v432
        %v689 = vunpack.c.l.b16 %v433
        %v690 = vunpack.c.l.b16 %v434
        %v691 = vunpack.c.l.b16 %v435
        %v692 = vunpack.c.l.b16 %v436
        %v693 = vunpack.c.l.b16 %v437
        %v694 = vunpack.c.l.b16 %v438
        %v695 = vunpack.c.l.b16 %v439
        %v696 = vunpack.c.l.b16 %v440
        %v697 = vunpack.c.l.b16 %v441
        %v698 = vunpack.c.l.b16 %v442
        %v699 = vunpack.c.l.b16 %v443
        %v700 = vunpack.c.l.b16 %v444
        %v701 = vunpack.c.l.b16 %v445
        %v702 = vunpack.c.l.b16 %v446
        %v703 = vunpack.c.l.b16 %v447
        %v704 = vunpack.c.l.b16 %v448
        %v705 = vunpack.c.l.b16 %v449
        %v706 = vunpack.c.l.b16 %v450
        %v707 = vunpack.c.l.b16 %v451
        %v708 = vunpack.c.l.b16 %v452
        %v709 = vunpack.c.l.b16 %v453
        %v710 = vunpack.c.l.b16 %v454
        %v711 = vunpack.c.l.b16 %v455
        %v712 = vunpack.c.l.b16 %v456
        %v713 = vunpack.c.l.b16 %v457
        %v714 = vunpack.c.l.b16 %v458
        %v715 = vunpack.c.l.b16 %v459
        %v716 = vunpack.c.l.b16 %v460
        %v717 = vunpack.c.l.b16 %v461
        %v718 = vunpack.c.l.b16 %v462
        %v719 = vunpack.c.l.b16 %v463
        %v720 = vunpack.c.l.b16 %v464
        %v721 = vunpack.c.l.b16 %v465
        %v722 = vunpack.c.l.b16 %v466
        %v723 = vunpack.c.l.b16 %v467
        %v724 = vunpack.c.l.b16 %v468
        %v725 = vunpack.c.l.b16 %v469
        %v726 = vpack.c.b16 %v599, %v598
        %v727 = vpack.c.b16 %v601, %v600
        %v728 = vpack.c.b16 %v603, %v602
        %v729 = vpack.c.b16 %v605, %v604
        %v730 = vpack.c.b16 %v607, %v606
        %v731 = vpack.c.b16 %v609, %v608
        %v732 = vpack.c.b16 %v611, %v610
        %v733 = vpack.c.b16 %v613, %v612
        %v734 = vpack.c.b16 %v615, %v614
        %v735 = vpack.c.b16 %v617, %v616
        %v736 = vpack.c.b16 %v619, %v618
        %v737 = vpack.c.b16 %v621, %v620
        %v738 = vpack.c.b16 %v623, %v622
        %v739 = vpack.c.b16 %v625, %v624
        %v740 = vpack.c.b16 %v627, %v626
        %v741 = vpack.c.b16 %v629, %v628
        %v742 = vpack.c.b16 %v631, %v630
        %v743 = vpack.c.b16 %v633, %v632
        %v744 = vpack.c.b16 %v635, %v634
        %v745 = vpack.c.b16 %v637, %v636
        %v746 = vpack.c.b16 %v639, %v638
        %v747 = vpack.c.b16 %v641, %v640
        %v748 = vpack.c.b16 %v643, %v642
        %v749 = vpack.c.b16 %v645, %v644
        %v750 = vpack.c.b16 %v647, %v646
        %v751 = vpack.c.b16 %v649, %v648
        %v752 = vpack.c.b16 %v651, %v650
        %v753 = vpack.c.b16 %v653, %v652
        %v754 = vpack.c.b16 %v655, %v654
        %v755 = vpack.c.b16 %v657, %v656
        %v756 = vpack.c.b16 %v659, %v658
        %v757 = vpack.c.b16 %v661, %v660
        %v758 = vpack.c.b16 %v663, %v662
        %v759 = vpack.c.b16 %v665, %v664
        %v760 = vpack.c.b16 %v667, %v666
        %v761 = vpack.c.b16 %v669, %v668
        %v762 = vpack.c.b16 %v671, %v670
        %v763 = vpack.c.b16 %v673, %v672
        %v764 = vpack.c.b16 %v675, %v674
        %v765 = vpack.c.b16 %v677, %v676
        %v766 = vpack.c.b16 %v679, %v678
        %v767 = vpack.c.b16 %v681, %v680
        %v768 = vpack.c.b16 %v683, %v682
        %v769 = vpack.c.b16 %v685, %v684
        %v770 = vpack.c.b16 %v687, %v686
        %v771 = vpack.c.b16 %v689, %v688
        %v772 = vpack.c.b16 %v691, %v690
        %v773 = vpack.c.b16 %v693, %v692
        %v774 = vpack.c.b16 %v695, %v694
        %v775 = vpack.c.b16 %v697, %v696
        %v776 = vpack.c.b16 %v699, %v698
        %v777 = vpack.c.b16 %v701, %v700
        %v778 = vpack.c.b16 %v703, %v702
        %v779 = vpack.c.b16 %v705, %v704
        %v780 = vpack.c.b16 %v707, %v706
        %v781 = vpack.c.b16 %v709, %v708
        %v782 = vpack.c.b16 %v711, %v710
        %v783 = vpack.c.b16 %v713, %v712
        %v784 = vpack.c.b16 %v715, %v714
        %v785 = vpack.c.b16 %v717, %v716
        %v786 = vpack.c.b16 %v719, %v718
        %v787 = vpack.c.b16 %v721, %v720
        %v788 = vpack.c.b16 %v723, %v722
        %v789 = vpack.c.b16 %v725, %v724
        %854 = vmatpush.bf16.msra.mxu0 %v733
        %855 = vmatpush.bf16.msra.mxu0 %v732
        %856 = vmatpush.bf16.msra.mxu0 %v731
        %857 = vmatpush.bf16.msra.mxu0 %v730
        %858 = vmatpush.bf16.msra.mxu0 %v729
        %859 = vmatpush.bf16.msra.mxu0 %v728
        %860 = vmatpush.bf16.msra.mxu0 %v727
        %861 = vmatpush.bf16.msra.mxu0 %v726
        %862 = vmatmul.bf16.gmra.mxu0 %v334
        %v863 = vpop.f32.mrf.mxu0
        %v864 = vadd.f32 0.0, %v863
        %v865 = vpop.f32.mrf.mxu0
        %v866 = vadd.f32 0.0, %v865
        %867 = vdwg.mxu0
        %868 = vmatpush.bf16.msra.mxu0 %v741
        %869 = vmatpush.bf16.msra.mxu0 %v740
        %870 = vmatpush.bf16.msra.mxu0 %v739
        %871 = vmatpush.bf16.msra.mxu0 %v738
        %872 = vmatpush.bf16.msra.mxu0 %v737
        %873 = vmatpush.bf16.msra.mxu0 %v736
        %874 = vmatpush.bf16.msra.mxu0 %v735
        %875 = vmatpush.bf16.msra.mxu0 %v734
        %876 = vmatmul.bf16.gmra.mxu0 %v335
        %v877 = vpop.f32.mrf.mxu0
        %v878 = vadd.f32 %v864, %v877
        %v879 = vpop.f32.mrf.mxu0
        %v880 = vadd.f32 %v866, %v879
        %881 = vdwg.mxu0
        %882 = vmatpush.bf16.msra.mxu0 %v749
        %883 = vmatpush.bf16.msra.mxu0 %v748
        %884 = vmatpush.bf16.msra.mxu0 %v747
        %885 = vmatpush.bf16.msra.mxu0 %v746
        %886 = vmatpush.bf16.msra.mxu0 %v745
        %887 = vmatpush.bf16.msra.mxu0 %v744
        %888 = vmatpush.bf16.msra.mxu0 %v743
        %889 = vmatpush.bf16.msra.mxu0 %v742
        %890 = vmatmul.bf16.gmra.mxu0 %v336
        %v891 = vpop.f32.mrf.mxu0
        %v892 = vadd.f32 %v878, %v891
        %v893 = vpop.f32.mrf.mxu0
        %v894 = vadd.f32 %v880, %v893
        %895 = vdwg.mxu0
        %896 = vmatpush.bf16.msra.mxu0 %v757
        %897 = vmatpush.bf16.msra.mxu0 %v756
        %898 = vmatpush.bf16.msra.mxu0 %v755
        %899 = vmatpush.bf16.msra.mxu0 %v754
        %900 = vmatpush.bf16.msra.mxu0 %v753
        %901 = vmatpush.bf16.msra.mxu0 %v752
        %902 = vmatpush.bf16.msra.mxu0 %v751
        %903 = vmatpush.bf16.msra.mxu0 %v750
        %904 = vmatmul.bf16.gmra.mxu0 %v337
        %v905 = vpop.f32.mrf.mxu0
        %v906 = vadd.f32 %v892, %v905
        %v907 = vpop.f32.mrf.mxu0
        %v908 = vadd.f32 %v894, %v907
        %909 = vdwg.mxu0
        %910 = vmatpush.bf16.msra.mxu0 %v765
        %911 = vmatpush.bf16.msra.mxu0 %v764
        %912 = vmatpush.bf16.msra.mxu0 %v763
        %913 = vmatpush.bf16.msra.mxu0 %v762
        %914 = vmatpush.bf16.msra.mxu0 %v761
        %915 = vmatpush.bf16.msra.mxu0 %v760
        %916 = vmatpush.bf16.msra.mxu0 %v759
        %917 = vmatpush.bf16.msra.mxu0 %v758
        %918 = vmatmul.bf16.gmra.mxu0 %v338
        %v919 = vpop.f32.mrf.mxu0
        %v920 = vadd.f32 %v906, %v919
        %v921 = vpop.f32.mrf.mxu0
        %v922 = vadd.f32 %v908, %v921
        %923 = vdwg.mxu0
        %924 = vmatpush.bf16.msra.mxu0 %v773
        %925 = vmatpush.bf16.msra.mxu0 %v772
        %926 = vmatpush.bf16.msra.mxu0 %v771
        %927 = vmatpush.bf16.msra.mxu0 %v770
        %928 = vmatpush.bf16.msra.mxu0 %v769
        %929 = vmatpush.bf16.msra.mxu0 %v768
        %930 = vmatpush.bf16.msra.mxu0 %v767
        %931 = vmatpush.bf16.msra.mxu0 %v766
        %932 = vmatmul.bf16.gmra.mxu0 %v339
        %v933 = vpop.f32.mrf.mxu0
        %v934 = vadd.f32 %v920, %v933
        %v935 = vpop.f32.mrf.mxu0
        %v936 = vadd.f32 %v922, %v935
        %937 = vdwg.mxu0
        %938 = vmatpush.bf16.msra.mxu0 %v781
        %939 = vmatpush.bf16.msra.mxu0 %v780
        %940 = vmatpush.bf16.msra.mxu0 %v779
        %941 = vmatpush.bf16.msra.mxu0 %v778
        %942 = vmatpush.bf16.msra.mxu0 %v777
        %943 = vmatpush.bf16.msra.mxu0 %v776
        %944 = vmatpush.bf16.msra.mxu0 %v775
        %945 = vmatpush.bf16.msra.mxu0 %v774
        %946 = vmatmul.bf16.gmra.mxu0 %v340
        %v947 = vpop.f32.mrf.mxu0
        %v948 = vadd.f32 %v934, %v947
        %v949 = vpop.f32.mrf.mxu0
        %v950 = vadd.f32 %v936, %v949
        %951 = vdwg.mxu0
        %952 = vmatpush.bf16.msra.mxu0 %v789
        %953 = vmatpush.bf16.msra.mxu0 %v788
        %954 = vmatpush.bf16.msra.mxu0 %v787
        %955 = vmatpush.bf16.msra.mxu0 %v786
        %956 = vmatpush.bf16.msra.mxu0 %v785
        %957 = vmatpush.bf16.msra.mxu0 %v784
        %958 = vmatpush.bf16.msra.mxu0 %v783
        %959 = vmatpush.bf16.msra.mxu0 %v782
        %960 = vmatmul.bf16.gmra.mxu0 %v341
        %v961 = vpop.f32.mrf.mxu0
        %v962 = vadd.f32 %v948, %v961
        %v963 = vpop.f32.mrf.mxu0
        %v964 = vadd.f32 %v950, %v963
        %965 = vdwg.mxu0
        %v966 = vmul.f32 %v962, 0.125
        %v967 = vmul.f32 %v964, 0.125
        %v968 = vlog2.pop %v966
        %v969 = vmul.f32 %v968, 0.6931472
        %v970 = vlog2.pop %v967
        %v971 = vmul.f32 %v970, 0.6931472
        %v972 = vstv %s220
        %v973 = vmul.f32 %v972, %v969
        %v974 = vmul.f32 %v972, %v971
        %v975 = vmul.f32 %v973, 1.442695
        %v976 = vpow.pop %v975
        %v977 = vmul.f32 %v974, 1.442695
        %v978 = vpow.pop %v977
        %979 = vst [vmem:[%s205] sm:$0xff] %v976
        %980 = vst [vmem:[%s205 + $0x8] sm:$0xff] %v978
        %s981 = sand.u32 %s110, 1
        %s982 = scalar_lea.sflag [#allocation3], %s981
        %s983 = sand.u32 %s110, 1
        %s984 = smul.addr %s983, 16
        %s985 = scalar_lea.vmem [#allocation5], %s984
        // Predicated region
        $region37: #{gem_forward.1} parent=31 // pred_check
          %p986 = pneg %p120
        $region38: #{gem_forward.1} parent=31 // pred_check_branch
          %988 = sbr.rel (%p986) target = $region40
        $region39: #{gem_forward.1} parent=31 // pred_region
          %s989 = smul.u32 2, %s22
          %991 = vsyncadd %s982, 0
          %s992 = sadd.s32 %s23, %s989
          %s993 = smul.addr %s992, 8
          %s994 = scalar_lea.hbm %s3, %s993
          %s995 = sshll.u32 %s985, 4
          %s996 = int_to_ptr.vmem [resolvable:$true] %s995
          %s997 = sshll.u32 %s994, 4
          %s998 = int_to_ptr.hbm [resolvable:$true] %s997
          %1003 = dma.vmem_to_hbm [thread:$0]  %s996, 256, %s998, %s982, 128, 128, 8
        $region40: #{gem_forward.1} parent=31 // pred_fallthru
          _
      $region32: #{gem_forward.1} parent=5 // pred_fallthru
        _
      %p1004 = scmp.le.s32.totalorder 2, %s13
      // Predicated region
      $region41: #{gem_forward.1} parent=5 // pred_check
        %p1005 = pneg %p1004
      $region42: #{gem_forward.1} parent=5 // pred_check_branch
        %1007 = sbr.rel (%p1005) target = $region44
      $region43: #{gem_forward.1} parent=5 // pred_region
        %s1008 = ssub.s32 %s13, 2
        // Predicated region
        $region45: #{gem_forward.1} parent=43 // pred_check
          %p1009 = pneg %p126
        $region46: #{gem_forward.1} parent=43 // pred_check_branch
          %1011 = sbr.rel (%p1009) target = $region48
        $region47: #{gem_forward.1} parent=43 // pred_region
          %s1012 = sand.u32 %s111, 1
          %s1013 = scalar_lea.sflag [#allocation3], %s1012
          %s1014 = sand.u32 %s111, 1
          %s1015 = smul.addr %s1014, 16
          %s1016 = scalar_lea.vmem [#allocation5], %s1015
          %1018 = dma.done %s1013, 256
        $region48: #{gem_forward.1} parent=43 // pred_fallthru
          _
      $region44: #{gem_forward.1} parent=5 // pred_fallthru
        _
    $region6: #{gem_forward.1} parent=1 // loop_footer
      %s17 = sadd.s32 1, %s13
    $region7: #{gem_forward.1} parent=1 // loop_footer_branch
      %12 = sbr.rel target = $region3
    $region8: #{gem_forward.1} parent=1 // loop_exit
      _
    %1019 = vsyncpa [#allocation3], 1
    %s1020 = scalar_lea.sflag [#allocation3], 1
    %1021 = vsyncpa %s1020, 1
    %1022 = vsyncpa [#allocation4], 1
    %s1023 = scalar_lea.sflag [#allocation4], 1
    %1024 = vsyncpa %s1023, 1

</llo_original>
